<compile_context>
chip_gen: v7x
topology: tpu7x:2x2x1
jax: 0.10.0
libtpu: 0.0.40
codegen_flags: <defaults>
</compile_context>

<pallas_src>
import math

import jax
import jax.numpy as jnp
from jax.experimental import pallas as pl
from jax.experimental.pallas import tpu as pltpu


def _cdiv(a: int, b: int) -> int:
    return -(-a // b)


def _round_down8(n: int) -> int:
    return (n // 8) * 8


def _round_up(n: int, m: int) -> int:
    return _cdiv(n, m) * m


def _vmem_budget():
    """(per-x-buffer target bytes, vmem_limit_bytes), chosen per chip generation."""
    try:
        cap = pltpu.get_tpu_info().vmem_capacity_bytes
    except Exception:
        cap = 64 << 20  # conservative (v7x has 64 MiB per TensorCore)
    if cap >= (96 << 20):          # v5e / v6e: 128 MiB physical VMEM
        return 4 << 20, 64 << 20
    return 2 << 20, 32 << 20       # v7x: 64 MiB physical VMEM


def _choose_tiles(B, s_f, lane_w, itemsize, target_bytes, table_cap_bytes):
    """Pick (batch_tile, seq_tile) for x blocks of shape (bt, st, lane_w).

    st is a multiple of 8 (or the full folded extent when it is < 8). Neither
    tile has to divide its extent: the grid uses cdiv and Pallas masks the tail,
    so there is no "full extent" fallback that could blow VMEM.
    """
    row_bytes = lane_w * itemsize                       # one (1, 1, lane_w) slab of x
    st_min = s_f if s_f < 8 else 8
    st_max = s_f if s_f < 8 else _round_down8(s_f)
    # Cap the resident sin/cos delta table (2 * st * lane_w * 4 B, double-buffered).
    st_tbl = max(st_min, min(st_max, _round_down8(table_cap_bytes // (8 * lane_w))))
    # Whole batch per block when it fits the budget; otherwise tile the batch.
    if B * st_min * row_bytes <= target_bytes:
        bt = B
    else:
        bt = min(B, max(1, target_bytes // (st_min * row_bytes)))
    st = max(st_min, min(st_tbl, _round_down8(target_bytes // max(bt * row_bytes, 1))))
    # v7x shards "parallel" grid axes across 2 TensorCores; keep >= 2 grid steps
    # (also restores DMA/compute overlap on single-core chips).
    if _cdiv(B, bt) * _cdiv(s_f, st) < 2:
        if s_f >= 16:
            st = max(8, _round_up(_cdiv(s_f, 2), 8))
        elif B >= 2:
            bt = _cdiv(B, 2)
    return bt, st


def _build_tables(d_model: int, fold: int, seq_tile: int):
    """Constant tables (f32), computed once in the wrapper.

    base_tbl  (2, fold*d_model): row0 = fold*div  (per-lane frequency step per folded row)
                                 row1 = off*div + phase  (phase: 0 even lane, pi/2 odd lane)
    delta_tbl (2, seq_tile, fold*d_model): sin / cos of (r_rel * fold * div).
    """
    half = jnp.arange(0, d_model, 2, dtype=jnp.float32)
    div_half = jnp.exp(half * (-math.log(10000.0) / d_model))        # (D//2,)
    div_full = jnp.repeat(div_half, 2)                               # (D,) lane l -> div[l//2]
    phase = jnp.tile(jnp.array([0.0, math.pi / 2.0], jnp.float32),
                     d_model // 2)                                    # even->sin, odd->cos
    div_t = jnp.tile(div_full, fold)                                  # (lane_w,)
    phase_t = jnp.tile(phase, fold)
    off_t = jnp.repeat(jnp.arange(fold, dtype=jnp.float32), d_model)  # lane -> folded offset
    div_fold = float(fold) * div_t
    bias = off_t * div_t + phase_t
    base_tbl = jnp.stack([div_fold, bias], axis=0)                    # (2, lane_w)
    r_rel = jnp.arange(seq_tile, dtype=jnp.float32)[:, None]          # (st, 1)
    delta = r_rel * div_fold[None, :]                                 # (st, lane_w)
    delta_tbl = jnp.stack([jnp.sin(delta), jnp.cos(delta)], axis=0)   # (2, st, lane_w)
    return base_tbl, delta_tbl


def _pe_add_kernel(base_ref, delta_ref, x_ref, o_ref, pe_ref):
    # base_ref : (2, lane_w)          row0 = fold*div, row1 = off*div + phase
    # delta_ref: (2, st, lane_w)      [sin, cos] of (r_rel * fold * div)    (resident)
    # x_ref    : (bt, st, lane_w)     o_ref: same;  pe_ref: (st, lane_w) f32 scratch
    st = pe_ref.shape[0]
    row_start = jax.lax.convert_element_type(pl.program_id(1) * st, jnp.float32)
    div_fold = base_ref[0:1, :]                 # (1, lane_w)
    bias = base_ref[1:2, :]                     # (1, lane_w)
    base = row_start * div_fold + bias          # angle of the tile's first folded row
    sin_b = jnp.sin(base)                       # only 2*lane_w transcendentals per tile
    cos_b = jnp.cos(base)
    # sin(base + delta) = sin(base)cos(delta) + cos(base)sin(delta): 2 mul + 1 add / elem.
    pe_ref[...] = sin_b * delta_ref[1] + cos_b * delta_ref[0]
    # PE materialized once per tile in VMEM, broadcast-added over the batch rows.
    o_ref[...] = (x_ref[...] + pe_ref[...][None, :, :]).astype(o_ref.dtype)


def positional_encoding(x: jax.Array) -> jax.Array:
    """x: (B, S, D) float array. Returns x + pe[:, :S, :] (same shape & dtype)."""
    B, S, D = x.shape
    assert D % 2 == 0, "d_model must be even (as in the PyTorch module)"

    # Lane-dense folding for D not a multiple of 128: fold `fold` consecutive
    # sequence positions into the lane axis (pure reshape, no data movement).
    fold = 1 if D % 128 == 0 else 128 // math.gcd(D, 128)

    S_pad = _round_up(S, fold)
    if S_pad != S:
        # Keep the output lane-dense for awkward S (masked partial stores were the
        # single biggest measured lever); pad/slice only hits this rare case.
        x_in = jnp.pad(x, ((0, 0), (0, S_pad - S), (0, 0)))
    else:
        x_in = x
    lane_w = fold * D
    s_f = S_pad // fold
    x_f = x_in.reshape(B, s_f, lane_w)

    itemsize = jnp.dtype(x.dtype).itemsize
    target_bytes, vmem_limit = _vmem_budget()
    bt, st = _choose_tiles(B, s_f, lane_w, itemsize, target_bytes,
                           table_cap_bytes=2 << 20)
    base_tbl, delta_tbl = _build_tables(D, fold, st)

    grid = (_cdiv(B, bt), _cdiv(s_f, st))
    out_f = pl.pallas_call(
        _pe_add_kernel,
        out_shape=jax.ShapeDtypeStruct((B, s_f, lane_w), x.dtype),
        grid=grid,
        in_specs=[
            pl.BlockSpec((2, lane_w), lambda ib, js: (0, 0)),           # base table (resident)
            pl.BlockSpec((2, st, lane_w), lambda ib, js: (0, 0, 0)),    # sin/cos delta table
            pl.BlockSpec((bt, st, lane_w), lambda ib, js: (ib, js, 0)),  # x tile
        ],
        out_specs=pl.BlockSpec((bt, st, lane_w), lambda ib, js: (ib, js, 0)),
        scratch_shapes=[pltpu.VMEM((st, lane_w), jnp.float32)],
        compiler_params=pltpu.CompilerParams(
            dimension_semantics=("parallel", "parallel"),
            vmem_limit_bytes=vmem_limit,
        ),
    )(base_tbl, delta_tbl, x_f)

    out = out_f.reshape(B, S_pad, D)
    if S_pad != S:
        out = out[:, :S, :]
    return out


def positional_encoding_ref(x: jax.Array, max_len: int = 10000) -> jax.Array:
    """Pure-JAX reference mirroring the PyTorch module exactly."""
    B, S, D = x.shape
    position = jnp.arange(0, max_len, dtype=jnp.float32)[:, None]          # (max_len, 1)
    div_term = jnp.exp(jnp.arange(0, D, 2, dtype=jnp.float32)
                       * (-math.log(10000.0) / D))                          # (D//2,)
    pe = jnp.zeros((max_len, D), dtype=jnp.float32)
    pe = pe.at[:, 0::2].set(jnp.sin(position * div_term))
    pe = pe.at[:, 1::2].set(jnp.cos(position * div_term))
    return x + pe[None, :S, :].astype(x.dtype)


if __name__ == "__main__":
    # Shapes consistent with the module's forward: (batch, seq, d_model).
    key = jax.random.PRNGKey(0)

    # Primary small shape (exercises the lane-folding path: D=32 -> fold=4).
    B, S, D = 2, 8, 32
    x = jax.random.normal(key, (B, S, D), dtype=jnp.float32)
    out = jax.block_until_ready(positional_encoding(x))
    ref = positional_encoding_ref(x)
    assert out.shape == ref.shape and out.dtype == ref.dtype
    # angle-addition decomposition differs from the one-shot reference by a few ulps
    assert jnp.allclose(out, ref, atol=1e-4, rtol=1e-5), "mismatch vs reference (fold path)"

    # Second shape: D multiple of 128 (fold=1) with a 2-step sequence grid.
    x2 = jax.random.normal(jax.random.PRNGKey(0), (2, 64, 128), dtype=jnp.float32)
    out2 = jax.block_until_ready(positional_encoding(x2))
    ref2 = positional_encoding_ref(x2)
    assert jnp.allclose(out2, ref2, atol=1e-4, rtol=1e-5), "mismatch vs reference (wide path)"

    print("KERNEL_OK")
</pallas_src>

<mosaic_0001>
module attributes {stable_mosaic.version = 11 : i64} {
  func.func @_pe_add_kernel(%arg0: i32, %arg1: i32, %arg2: memref<2x128xf32, #tpu.memory_space<vmem>>, %arg3: memref<2x2x128xf32, #tpu.memory_space<vmem>>, %arg4: memref<1x2x128xf32, #tpu.memory_space<vmem>>, %arg5: memref<1x2x128xf32, #tpu.memory_space<vmem>>, %arg6: memref<2x128xf32, #tpu.memory_space<vmem>>) attributes {dimension_semantics = [#tpu.dimension_semantics<parallel>, #tpu.dimension_semantics<parallel>], iteration_bounds = array<i64: 2, 1>, scalar_prefetch = 0 : i64, scratch_operands = 1 : i64, tpu.core_type = #tpu.core_type<tc>, window_params = [{pipeline_mode = #tpu.pipeline_mode<synchronous>, transform_indices = @transform_0, window_bounds = array<i64: 2, 128>}, {pipeline_mode = #tpu.pipeline_mode<synchronous>, transform_indices = @transform_1, window_bounds = array<i64: 2, 2, 128>}, {transform_indices = @transform_2, window_bounds = array<i64: 1, 2, 128>}, {transform_indices = @transform_3, window_bounds = array<i64: 1, 2, 128>}]} {
    %c2_i32 = arith.constant 2 : i32
    %0 = arith.muli %arg1, %c2_i32 : i32
    %1 = arith.sitofp %0 : i32 to f32
    %c0 = arith.constant 0 : index
    %c0_0 = arith.constant 0 : index
    %2 = vector.load %arg2[%c0, %c0_0] : memref<2x128xf32, #tpu.memory_space<vmem>>, vector<1x128xf32>
    %c1 = arith.constant 1 : index
    %c0_1 = arith.constant 0 : index
    %3 = vector.load %arg2[%c1, %c0_1] : memref<2x128xf32, #tpu.memory_space<vmem>>, vector<1x128xf32>
    %4 = vector.broadcast %1 : f32 to vector<1x128xf32>
    %5 = arith.mulf %4, %2 : vector<1x128xf32>
    %6 = arith.addf %5, %3 : vector<1x128xf32>
    %7 = math.sin %6 : vector<1x128xf32>
    %8 = math.cos %6 : vector<1x128xf32>
    %c1_2 = arith.constant 1 : index
    %c0_3 = arith.constant 0 : index
    %c0_4 = arith.constant 0 : index
    %9 = vector.load %arg3[%c1_2, %c0_3, %c0_4] : memref<2x2x128xf32, #tpu.memory_space<vmem>>, vector<1x2x128xf32>
    %10 = vector.shape_cast %9 : vector<1x2x128xf32> to vector<2x128xf32>
    %11 = vector.broadcast %7 : vector<1x128xf32> to vector<2x128xf32>
    %12 = arith.mulf %11, %10 : vector<2x128xf32>
    %c0_5 = arith.constant 0 : index
    %c0_6 = arith.constant 0 : index
    %c0_7 = arith.constant 0 : index
    %13 = vector.load %arg3[%c0_5, %c0_6, %c0_7] : memref<2x2x128xf32, #tpu.memory_space<vmem>>, vector<1x2x128xf32>
    %14 = vector.shape_cast %13 : vector<1x2x128xf32> to vector<2x128xf32>
    %15 = vector.broadcast %8 : vector<1x128xf32> to vector<2x128xf32>
    %16 = arith.mulf %15, %14 : vector<2x128xf32>
    %17 = arith.addf %12, %16 : vector<2x128xf32>
    %c0_8 = arith.constant 0 : index
    %c0_9 = arith.constant 0 : index
    %18 = vector.load %arg6[%c0_8, %c0_9] : memref<2x128xf32, #tpu.memory_space<vmem>>, vector<2x128xf32>
    tpu.vector_store %arg6[%c0_8, %c0_9], %17 {strides = array<i32>} : memref<2x128xf32, #tpu.memory_space<vmem>>, vector<2x128xf32>,
    %c0_10 = arith.constant 0 : index
    %c0_11 = arith.constant 0 : index
    %c0_12 = arith.constant 0 : index
    %19 = vector.load %arg4[%c0_10, %c0_11, %c0_12] : memref<1x2x128xf32, #tpu.memory_space<vmem>>, vector<1x2x128xf32>
    %c0_13 = arith.constant 0 : index
    %c0_14 = arith.constant 0 : index
    %20 = vector.load %arg6[%c0_13, %c0_14] : memref<2x128xf32, #tpu.memory_space<vmem>>, vector<2x128xf32>
    %21 = vector.shape_cast %20 : vector<2x128xf32> to vector<1x2x128xf32>
    %22 = arith.addf %19, %21 : vector<1x2x128xf32>
    %c0_15 = arith.constant 0 : index
    %c0_16 = arith.constant 0 : index
    %c0_17 = arith.constant 0 : index
    %23 = vector.load %arg5[%c0_15, %c0_16, %c0_17] : memref<1x2x128xf32, #tpu.memory_space<vmem>>, vector<1x2x128xf32>
    tpu.vector_store %arg5[%c0_15, %c0_16, %c0_17], %22 {strides = array<i32>} : memref<1x2x128xf32, #tpu.memory_space<vmem>>, vector<1x2x128xf32>,
    return
  }
  func.func @transform_0(%arg0: i32, %arg1: i32) -> (i32, i32) {
    %c0_i32 = arith.constant 0 : i32
    %c0_i32_0 = arith.constant 0 : i32
    %c0_i32_1 = arith.constant 0 : i32
    return %c0_i32, %c0_i32_0 : i32, i32
  }
  func.func @transform_1(%arg0: i32, %arg1: i32) -> (i32, i32, i32) {
    %c0_i32 = arith.constant 0 : i32
    %c0_i32_0 = arith.constant 0 : i32
    %c0_i32_1 = arith.constant 0 : i32
    %c0_i32_2 = arith.constant 0 : i32
    return %c0_i32, %c0_i32_0, %c0_i32_1 : i32, i32, i32
  }
  func.func @transform_2(%arg0: i32, %arg1: i32) -> (i32, i32, i32) {
    %c0_i32 = arith.constant 0 : i32
    %c0_i32_0 = arith.constant 0 : i32
    return %arg0, %arg1, %c0_i32 : i32, i32, i32
  }
  func.func @transform_3(%arg0: i32, %arg1: i32) -> (i32, i32, i32) {
    %c0_i32 = arith.constant 0 : i32
    %c0_i32_0 = arith.constant 0 : i32
    return %arg0, %arg1, %c0_i32 : i32, i32, i32
  }
}

</mosaic_0001>

<llo_original>
// kernel: tpu_custom_call.1
$region0: #{tpu_custom_call.1}
  #allocation0 [shape = 'u32[]', space=smem, size = 0x4, offset = 0x4, fixed_abs, tag = 'smem constant byte address 0x4 - core index']
  #allocation1 [shape = 'u32[144,128]{1,0:T(1,128)}', space=vmem, size = 0x12000, scoped, tag = 'internal scratch']
  #allocation2 [shape = 'f32[2,128]{1,0:T(2,128)}', space=vmem, size = 0x400, scoped, tag = 'scratch operand']
  %s0 = inlined_call_operand.hbm [shape: f32[2,128], index: 0, kind: input, shape index: {}]
  %s1 = inlined_call_operand.hbm [shape: f32[2,2,128], index: 1, kind: input, shape index: {}]
  %s2 = inlined_call_operand.vmem [shape: f32[2,2,128], index: 2, kind: input, shape index: {}]
  %s3 = inlined_call_operand.hbm [shape: f32[2,2,128], index: 3, kind: output, shape index: {}]
  %s4 = sld [smem:[#allocation0]]
  $region53: #{tpu_custom_call.1} parent=0
    _
  %s6 = ssub.s32 1, %s4
  %s7 = scalar_select 0, %s6, %s4
  $region1: #{tpu_custom_call.1} parent=0
    #allocation3 [shape = 'u8[1024]{0}', space=vmem, size = 0x400, scoped, tag = 'input window, operand 0, single buffered']
    #allocation4 [shape = 's32[2]{0}', space=sflag, size = 0x8, scoped, tag = 'scoped memory for tpu_custom_call.1']
    #allocation5 [shape = 's32[2]{0}', space=sflag, size = 0x8, scoped, tag = 'scoped memory for tpu_custom_call.1']
    #allocation6 [shape = 'u8[2048]{0}', space=vmem, size = 0x800, scoped, tag = 'input window, operand 1, single buffered']
    #allocation7 [shape = 's32[1]{0}', space=sflag, size = 0x4, scoped, tag = 'scoped memory for tpu_custom_call.1']
    #allocation8 [shape = 'u8[2048]{0}', space=vmem, size = 0x800, scoped, tag = 'output window, operand 0']
    %8 = vsyncpa [#allocation4], 0
    %9 = vsyncpa [#allocation7], 0
    %10 = vsyncpa [#allocation5], 0
    %s11 = scalar_lea.sflag [#allocation5], 1
    %12 = vsyncpa %s11, 0
    loop: start=0, step=1, limit=4
    $region2: #{tpu_custom_call.1} parent=1 // loop_pre_header
      _
    $region3: #{tpu_custom_call.1} parent=1 // loop_header
      %s14 = sphi 0, %s18
      %p15 = scmp.ge.s32.totalorder %s14, 4
      %s21 = sphi 0, %s33
      %s22 = sphi 0, %s29
      %s23 = sphi 0, %s21
      %s24 = sphi 0, %s22
      %s25 = sphi 0, %s23
      %s26 = sphi 0, %s24
      %s34 = sphi 0, %s34
      %s36 = sphi 0, %s34
      %s37 = sphi 0, %s36
      %s51 = sphi 0, %s37
      %s55 = sphi 0, %s55
      %s57 = sphi 0, %s55
      %s58 = sphi 0, %s57
      %s72 = sphi 0, %s58
      %s80 = sphi 0, %s82
      %s83 = sphi 0, %s80
      %s84 = sphi 0, %s83
      %s100 = sphi 0, %s84
      %s108 = sphi 0, %s110
      %s111 = sphi 0, %s108
      %s112 = sphi 0, %s111
      %s128 = sphi 0, %s112
    $region4: #{tpu_custom_call.1} parent=1 // loop_header_branch
      %17 = sbr.rel (%p15) target = $region8
    $region5: #{tpu_custom_call.1} parent=1 // loop_body
      %s19 = ssub.s32 %s14, 1
      %s20 = ssub.s32 %s14, 2
      %s27 = sadd.s32 1, %s22
      %p28 = scmp.ge.s32.totalorder %s27, 1
      %s29 = scalar_select %p28, 0, %s27
      %s30 = sadd.s32 1, %s21
      %s31 = scalar_select %p28, %s30, %s21
      %p32 = scmp.ge.s32.totalorder %s31, 2
      %s33 = scalar_select %p32, 0, %s31
      %s35 = sadd.s32 %s34, 1
      %p38 = scmp.eq.s32.totalorder %s14, 1
      %p39 = scmp.ne.s32.totalorder %s34, %s36
      %p40 = scmp.eq.s32.totalorder %s14, 0
      %p41 = por %p39, %p40
      %p42 = scmp.ne.s32.totalorder %s34, %s36
      %p43 = scmp.eq.s32.totalorder %s19, 1
      %p44 = por %p42, %p43
      %p45 = scmp.ne.s32.totalorder %s36, %s37
      %p46 = scmp.eq.s32.totalorder %s19, 0
      %p47 = por %p45, %p46
      %p48 = scmp.ne.s32.totalorder %s36, %s37
      %p49 = scmp.eq.s32.totalorder %s20, 1
      %p50 = por %p48, %p49
      %p52 = scmp.ne.s32.totalorder %s37, %s51
      %p53 = scmp.eq.s32.totalorder %s20, 0
      %p54 = por %p52, %p53
      %s56 = sadd.s32 %s55, 1
      %p59 = scmp.eq.s32.totalorder %s14, 1
      %p60 = scmp.ne.s32.totalorder %s55, %s57
      %p61 = scmp.eq.s32.totalorder %s14, 0
      %p62 = por %p60, %p61
      %p63 = scmp.ne.s32.totalorder %s55, %s57
      %p64 = scmp.eq.s32.totalorder %s19, 1
      %p65 = por %p63, %p64
      %p66 = scmp.ne.s32.totalorder %s57, %s58
      %p67 = scmp.eq.s32.totalorder %s19, 0
      %p68 = por %p66, %p67
      %p69 = scmp.ne.s32.totalorder %s57, %s58
      %p70 = scmp.eq.s32.totalorder %s20, 1
      %p71 = por %p69, %p70
      %p73 = scmp.ne.s32.totalorder %s58, %s72
      %p74 = scmp.eq.s32.totalorder %s20, 0
      %p75 = por %p73, %p74
      %s76 = ssub.s32 %s21, %s33
      %s77 = ssub.s32 %s22, %s29
      %s78 = sor.u32 %s76, %s77
      %p79 = scmp.eq.s32.totalorder %s78, 0
      %s81 = sadd.s32 %s80, 1
      %s82 = scalar_select %p79, %s80, %s81
      %p85 = pneg %p79
      %p86 = scmp.eq.s32.totalorder %s14, 1
      %p87 = por %p85, %p86
      %p88 = scmp.ne.s32.totalorder %s80, %s83
      %p89 = scmp.eq.s32.totalorder %s14, 0
      %p90 = por %p88, %p89
      %p91 = scmp.ne.s32.totalorder %s80, %s83
      %p92 = scmp.eq.s32.totalorder %s19, 1
      %p93 = por %p91, %p92
      %p94 = scmp.ne.s32.totalorder %s83, %s84
      %p95 = scmp.eq.s32.totalorder %s19, 0
      %p96 = por %p94, %p95
      %p97 = scmp.ne.s32.totalorder %s83, %s84
      %p98 = scmp.eq.s32.totalorder %s20, 1
      %p99 = por %p97, %p98
      %p101 = scmp.ne.s32.totalorder %s84, %s100
      %p102 = scmp.eq.s32.totalorder %s20, 0
      %p103 = por %p101, %p102
      %s104 = ssub.s32 %s21, %s33
      %s105 = ssub.s32 %s22, %s29
      %s106 = sor.u32 %s104, %s105
      %p107 = scmp.eq.s32.totalorder %s106, 0
      %s109 = sadd.s32 %s108, 1
      %s110 = scalar_select %p107, %s108, %s109
      %p113 = pneg %p107
      %p114 = scmp.eq.s32.totalorder %s14, 1
      %p115 = por %p113, %p114
      %p116 = scmp.ne.s32.totalorder %s108, %s111
      %p117 = scmp.eq.s32.totalorder %s14, 0
      %p118 = por %p116, %p117
      %p119 = scmp.ne.s32.totalorder %s108, %s111
      %p120 = scmp.eq.s32.totalorder %s19, 1
      %p121 = por %p119, %p120
      %p122 = scmp.ne.s32.totalorder %s111, %s112
      %p123 = scmp.eq.s32.totalorder %s19, 0
      %p124 = por %p122, %p123
      %p125 = scmp.ne.s32.totalorder %s111, %s112
      %p126 = scmp.eq.s32.totalorder %s20, 1
      %p127 = por %p125, %p126
      %p129 = scmp.ne.s32.totalorder %s112, %s128
      %p130 = scmp.eq.s32.totalorder %s20, 0
      %p131 = por %p129, %p130
      %p132 = scmp.le.s32.totalorder 1, %s14
      %p133 = scmp.lt.s32.totalorder %s14, 3
      %p134 = pnand %p132, %p133
      %p135 = pneg %p134
      // Predicated region
      $region9: #{tpu_custom_call.1} parent=5 // pred_check
        _
      $region10: #{tpu_custom_call.1} parent=5 // pred_check_branch
        %137 = sbr.rel (%p134) target = $region12
      $region11: #{tpu_custom_call.1} parent=5 // pred_region
        %s138 = ssub.s32 %s14, 1
        // Predicated region
        $region13: #{tpu_custom_call.1} parent=11 // pred_check
          %p139 = pneg %p47
        $region14: #{tpu_custom_call.1} parent=11 // pred_check_branch
          %141 = sbr.rel (%p139) target = $region16
        $region15: #{tpu_custom_call.1} parent=11 // pred_region
          %s143 = ssub.s32 32, 32
          %144 = vsyncadd [#allocation4], %s143
          %s146 = sshll.u32 [#allocation3], 4
          %s147 = int_to_ptr.vmem [resolvable:$true] %s146
          %149 = dma.hbm_to_vmem [thread:$0]  %s0, 32, %s147, [#allocation4]
        $region16: #{tpu_custom_call.1} parent=11 // pred_fallthru
          _
        // Predicated region
        $region17: #{tpu_custom_call.1} parent=11 // pred_check
          %p150 = pneg %p68
        $region18: #{tpu_custom_call.1} parent=11 // pred_check_branch
          %152 = sbr.rel (%p150) target = $region20
        $region19: #{tpu_custom_call.1} parent=11 // pred_region
          %s154 = ssub.s32 64, 64
          %155 = vsyncadd [#allocation7], %s154
          %s156 = sshll.u32 [#allocation6], 4
          %s157 = int_to_ptr.vmem [resolvable:$true] %s156
          %162 = dma.hbm_to_vmem [thread:$0]  %s1, 64, %s157, [#allocation7], 32, 32, 2
        $region20: #{tpu_custom_call.1} parent=11 // pred_fallthru
          _
      $region12: #{tpu_custom_call.1} parent=5 // pred_fallthru
        _
      %p163 = scmp.lt.s32.totalorder %s14, 2
      // Predicated region
      $region21: #{tpu_custom_call.1} parent=5 // pred_check
        %p164 = pneg %p163
      $region22: #{tpu_custom_call.1} parent=5 // pred_check_branch
        %166 = sbr.rel (%p164) target = $region24
      $region23: #{tpu_custom_call.1} parent=5 // pred_region
        // Predicated region
        $region25: #{tpu_custom_call.1} parent=23 // pred_check
          %p167 = pneg %p90
        $region26: #{tpu_custom_call.1} parent=23 // pred_check_branch
          %169 = sbr.rel (%p167) target = $region28
        $region27: #{tpu_custom_call.1} parent=23 // pred_region
          %p170 = scmp.lt.s32.totalorder %s21, 1
          %s171 = scalar_select %p170, %s21, 1
          %p172 = scmp.lt.s32.totalorder %s22, 0
          %s173 = scalar_select %p172, %s22, 0
          %s174 = sadd.s32 %s173, %s171
          %s175 = smul.addr %s174, 2
          %s176 = scalar_lea.vmem %s2, %s175
        $region28: #{tpu_custom_call.1} parent=23 // pred_fallthru
          _
      $region24: #{tpu_custom_call.1} parent=5 // pred_fallthru
        _
      %p177 = scmp.le.s32.totalorder 1, %s14
      %p178 = scmp.lt.s32.totalorder %s14, 3
      %p179 = pnand %p177, %p178
      %p180 = pneg %p179
      // Predicated region
      $region29: #{tpu_custom_call.1} parent=5 // pred_check
        _
      $region30: #{tpu_custom_call.1} parent=5 // pred_check_branch
        %182 = sbr.rel (%p179) target = $region32
      $region31: #{tpu_custom_call.1} parent=5 // pred_region
        %s183 = ssub.s32 %s14, 1
        // Predicated region
        $region33: #{tpu_custom_call.1} parent=31 // pred_check
          %p184 = pneg %p47
        $region34: #{tpu_custom_call.1} parent=31 // pred_check_branch
          %186 = sbr.rel (%p184) target = $region36
        $region35: #{tpu_custom_call.1} parent=31 // pred_region
          %187 = dma.done [#allocation4], 32
        $region36: #{tpu_custom_call.1} parent=31 // pred_fallthru
          _
        // Predicated region
        $region37: #{tpu_custom_call.1} parent=31 // pred_check
          %p188 = pneg %p68
        $region38: #{tpu_custom_call.1} parent=31 // pred_check_branch
          %190 = sbr.rel (%p188) target = $region40
        $region39: #{tpu_custom_call.1} parent=31 // pred_region
          %191 = dma.done [#allocation7], 64
        $region40: #{tpu_custom_call.1} parent=31 // pred_fallthru
          _
        %p192 = pneg %p47
        %p193 = pneg %p44
        %p194 = pneg %p68
        %p195 = pneg %p65
        %p196 = scmp.lt.s32.totalorder %s23, 1
        %s197 = scalar_select %p196, %s23, 1
        %p198 = scmp.lt.s32.totalorder %s24, 0
        %s199 = scalar_select %p198, %s24, 0
        %s200 = sadd.s32 %s199, %s197
        %s201 = smul.addr %s200, 2
        %s202 = scalar_lea.vmem %s2, %s201
        %p203 = pneg %p96
        %p204 = pneg %p93
        %p205 = pneg %p124
        %p206 = pneg %p121
        %s207 = sand.u32 %s111, 1
        %s208 = scalar_lea.sflag [#allocation5], %s207
        %s209 = sand.u32 %s111, 1
        %s210 = smul.addr %s209, 2
        %s211 = scalar_lea.vmem [#allocation8], %s210
        %p212 = scmp.lt.s32.totalorder %s23, 1
        %s213 = scalar_select %p212, %s23, 1
        %p214 = scmp.lt.s32.totalorder %s24, 0
        %s215 = scalar_select %p214, %s24, 0
        %s216 = sadd.s32 %s215, %s213
        %s217 = smul.addr %s216, 2
        %s218 = scalar_lea.vmem %s2, %s217
        %s219 = smul.u32 %s24, 2
        %s220 = scvt.s32.f32 %s219
        %v221 = vld [vmem:[#allocation3] sm:$0x1]
        %v222 = vld [vmem:[#allocation3 + $0x1] sm:$0x1]
        %v223 = vstv %s220
        %v224 = vmul.f32 %v223, %v221
        %v225 = vadd.f32 %v224, %v222
        %v226 = vand.u32 2147483647, %v225
        %vm227 = vcmp.le.f32.partialorder %v226, 0.7853982
        %vm228 = vcmp.lt.s32.totalorder %v225, 0
        %v229 = vand.u32 %v225, 2139095040
        %v230 = vshrl.u32 %v229, 23
        %v231 = vsub.s32 %v230, 127
        %v232 = vand.u32 2147483647, %v225
        %v233 = vand.u32 %v232, 8388607
        %v234 = vor.u32 %v233, 8388608
        %v235 = vsub.s32 0, %v234
        %v236 = vadd.s32 %v231, 1
        %vm237 = vcmp.gt.s32.totalorder %v236, 0
        %v238 = vsel %vm237, %v236, 0
        %v239 = vshrl.u32 %v238, 5
        %v240 = vand.u32 %v238, 31
        %v241 = vsub.s32 32, %v240
        %v242 = vshrl.u32 683565275, %v241
        %v243 = vshll.u32 683565275, %v240
        %v244 = vshrl.u32 2475754826, %v241
        %v245 = vor.u32 %v243, %v244
        %v246 = vshll.u32 2475754826, %v240
        %v247 = vshrl.u32 2131351028, %v241
        %v248 = vor.u32 %v246, %v247
        %v249 = vshll.u32 2131351028, %v240
        %v250 = vshrl.u32 2102212464, %v241
        %v251 = vor.u32 %v249, %v250
        %v252 = vshll.u32 2102212464, %v240
        %v253 = vshrl.u32 920167782, %v241
        %v254 = vor.u32 %v252, %v253
        %v255 = vshll.u32 920167782, %v240
        %v256 = vshrl.u32 1326507024, %v241
        %v257 = vor.u32 %v255, %v256
        %vm258 = vcmp.lt.s32.totalorder %v239, 1
        %vm259 = vcmp.lt.s32.totalorder %v239, 2
        %vm260 = vcmp.lt.s32.totalorder %v239, 3
        %vm261 = vcmp.lt.s32.totalorder %v239, 4
        %v262 = vsel %vm258, %v242, %v245
        %v263 = vsel %vm261, %v251, 2102212464
        %v264 = vsel %vm260, %v248, %v263
        %v265 = vsel %vm259, %v262, %v264
        %v266 = vsel %vm258, %v245, %v248
        %v267 = vsel %vm261, %v254, 920167782
        %v268 = vsel %vm260, %v251, %v267
        %v269 = vsel %vm259, %v266, %v268
        %v270 = vsel %vm258, %v248, %v251
        %v271 = vsel %vm261, %v257, 1326507024
        %v272 = vsel %vm260, %v254, %v271
        %v273 = vsel %vm259, %v270, %v272
        %v274 = vshll.u32 %v234, 8
        %v275 = vmul.u32.u64.compose %v274, %v273
        %v276 = vextract.low.u32 %v275
        %v277 = vextract.high.u32 %v275
        %v278 = vmul.u32.u64.compose %v274, %v269
        %v279 = vextract.low.u32 %v278
        %v280 = vextract.high.u32 %v278
        %v281 = vmul.u32 %v274, %v265
        %v282 = vadd.s32 %v277, %v279
        %vm283 = vc.u32 %v277, %v279
        %v284 = vadd.s32 %v280, 1
        %v285 = vsel %vm283, %v284, %v280
        %v286 = vadd.s32 %v281, %v285
        %v287 = vadd.s32 %v286, 536870912
        %v288 = vshrl.u32 %v287, 30
        %v289 = vshll.u32 %v288, 30
        %v290 = vsub.s32 %v286, %v289
        %vm291 = vcmp.lt.s32.totalorder %v290, 0
        %v292 = vsub.s32 0, %v290
        %v293 = vsel %vm291, %v292, %v290
        %v294 = vclz %v293
        %v295 = vsub.s32 %v294, 2
        %vm296 = vcmp.gt.s32.totalorder 0, %v295
        %v297 = vsel %vm296, 0, %v295
        %v298 = vsub.s32 32, %v297
        %v299 = vshll.u32 %v290, %v297
        %v300 = vshrl.u32 %v282, %v298
        %v301 = vor.u32 %v299, %v300
        %v302 = vsub.s32 4294967266, %v297
        %v303 = vadd.s32 %v302, 127
        %v304 = vshll.u32 %v303, 23
        %v305 = vor.u32 4788187, %v304
        %v306 = vand.u32 2147483647, %v305
        %v308 = vcvt.s32.f32 %v301
        %v309 = vmul.f32 %v308, %v306
        %v310 = vxor.u32 %v309, 2147483648
        %v311 = vsel %vm228, %v310, %v309
        %v312 = vsub.s32 4, %v288
        %v313 = vsel %vm228, %v312, %v288
        %v314 = vsel %vm227, %v225, %v311
        %v315 = vsel %vm227, 0, %v313
        %v316 = vcosq.f32.pop %v314
        %v317 = vsinq.f32.pop %v314
        %vm318 = vweird.f32 %v225
        %v319 = vadd.s32 %v315, 3
        %v320 = vand.u32 %v319, 3
        %vm321 = vcmp.lt.s32.totalorder %v320, 2
        %vm322 = vcmp.eq.s32.totalorder %v320, 0
        %v323 = vxor.u32 %v317, 2147483648
        %v324 = vsel %vm322, %v316, %v323
        %vm325 = vcmp.eq.s32.totalorder %v320, 2
        %v326 = vxor.u32 %v316, 2147483648
        %v327 = vsel %vm325, %v326, %v317
        %v328 = vsel %vm321, %v324, %v327
        %v329 = vsel %vm318, nan, %v328
        %v330 = vand.u32 2147483647, %v225
        %vm331 = vcmp.le.f32.partialorder %v330, 0.7853982
        %vm332 = vcmp.lt.s32.totalorder %v225, 0
        %v333 = vand.u32 %v225, 2139095040
        %v334 = vshrl.u32 %v333, 23
        %v335 = vsub.s32 %v334, 127
        %v336 = vand.u32 2147483647, %v225
        %v337 = vand.u32 %v336, 8388607
        %v338 = vor.u32 %v337, 8388608
        %v339 = vsub.s32 0, %v338
        %v340 = vadd.s32 %v335, 1
        %vm341 = vcmp.gt.s32.totalorder %v340, 0
        %v342 = vsel %vm341, %v340, 0
        %v343 = vshrl.u32 %v342, 5
        %v344 = vand.u32 %v342, 31
        %v345 = vsub.s32 32, %v344
        %v346 = vshrl.u32 683565275, %v345
        %v347 = vshll.u32 683565275, %v344
        %v348 = vshrl.u32 2475754826, %v345
        %v349 = vor.u32 %v347, %v348
        %v350 = vshll.u32 2475754826, %v344
        %v351 = vshrl.u32 2131351028, %v345
        %v352 = vor.u32 %v350, %v351
        %v353 = vshll.u32 2131351028, %v344
        %v354 = vshrl.u32 2102212464, %v345
        %v355 = vor.u32 %v353, %v354
        %v356 = vshll.u32 2102212464, %v344
        %v357 = vshrl.u32 920167782, %v345
        %v358 = vor.u32 %v356, %v357
        %v359 = vshll.u32 920167782, %v344
        %v360 = vshrl.u32 1326507024, %v345
        %v361 = vor.u32 %v359, %v360
        %vm362 = vcmp.lt.s32.totalorder %v343, 1
        %vm363 = vcmp.lt.s32.totalorder %v343, 2
        %vm364 = vcmp.lt.s32.totalorder %v343, 3
        %vm365 = vcmp.lt.s32.totalorder %v343, 4
        %v366 = vsel %vm362, %v346, %v349
        %v367 = vsel %vm365, %v355, 2102212464
        %v368 = vsel %vm364, %v352, %v367
        %v369 = vsel %vm363, %v366, %v368
        %v370 = vsel %vm362, %v349, %v352
        %v371 = vsel %vm365, %v358, 920167782
        %v372 = vsel %vm364, %v355, %v371
        %v373 = vsel %vm363, %v370, %v372
        %v374 = vsel %vm362, %v352, %v355
        %v375 = vsel %vm365, %v361, 1326507024
        %v376 = vsel %vm364, %v358, %v375
        %v377 = vsel %vm363, %v374, %v376
        %v378 = vshll.u32 %v338, 8
        %v379 = vmul.u32.u64.compose %v378, %v377
        %v380 = vextract.low.u32 %v379
        %v381 = vextract.high.u32 %v379
        %v382 = vmul.u32.u64.compose %v378, %v373
        %v383 = vextract.low.u32 %v382
        %v384 = vextract.high.u32 %v382
        %v385 = vmul.u32 %v378, %v369
        %v386 = vadd.s32 %v381, %v383
        %vm387 = vc.u32 %v381, %v383
        %v388 = vadd.s32 %v384, 1
        %v389 = vsel %vm387, %v388, %v384
        %v390 = vadd.s32 %v385, %v389
        %v391 = vadd.s32 %v390, 536870912
        %v392 = vshrl.u32 %v391, 30
        %v393 = vshll.u32 %v392, 30
        %v394 = vsub.s32 %v390, %v393
        %vm395 = vcmp.lt.s32.totalorder %v394, 0
        %v396 = vsub.s32 0, %v394
        %v397 = vsel %vm395, %v396, %v394
        %v398 = vclz %v397
        %v399 = vsub.s32 %v398, 2
        %vm400 = vcmp.gt.s32.totalorder 0, %v399
        %v401 = vsel %vm400, 0, %v399
        %v402 = vsub.s32 32, %v401
        %v403 = vshll.u32 %v394, %v401
        %v404 = vshrl.u32 %v386, %v402
        %v405 = vor.u32 %v403, %v404
        %v406 = vsub.s32 4294967266, %v401
        %v407 = vadd.s32 %v406, 127
        %v408 = vshll.u32 %v407, 23
        %v409 = vor.u32 4788187, %v408
        %v410 = vand.u32 2147483647, %v409
        %v412 = vcvt.s32.f32 %v405
        %v413 = vmul.f32 %v412, %v410
        %v414 = vxor.u32 %v413, 2147483648
        %v415 = vsel %vm332, %v414, %v413
        %v416 = vsub.s32 4, %v392
        %v417 = vsel %vm332, %v416, %v392
        %v418 = vsel %vm331, %v225, %v415
        %v419 = vsel %vm331, 0, %v417
        %v420 = vcosq.f32.pop %v418
        %v421 = vsinq.f32.pop %v418
        %vm422 = vweird.f32 %v225
        %v423 = vand.u32 %v419, 3
        %vm424 = vcmp.lt.s32.totalorder %v423, 2
        %vm425 = vcmp.eq.s32.totalorder %v423, 0
        %v426 = vxor.u32 %v421, 2147483648
        %v427 = vsel %vm425, %v420, %v426
        %vm428 = vcmp.eq.s32.totalorder %v423, 2
        %v429 = vxor.u32 %v420, 2147483648
        %v430 = vsel %vm428, %v429, %v421
        %v431 = vsel %vm424, %v427, %v430
        %v432 = vsel %vm422, nan, %v431
        %s433 = scalar_lea.vmem [#allocation6], 2
        %v434 = vld [vmem:[%s433] sm:$0x3]
        %v435 = vlaneseq
        %v436 = vshrl.u32 %v435, 7
        %v437 = vsub.s32 0, %v436
        %v438 = vrot.slane %v329, %v437
        %v439 = vmul.f32 %v438, %v434
        %v440 = vld [vmem:[#allocation6] sm:$0x3]
        %v441 = vlaneseq
        %v442 = vshrl.u32 %v441, 7
        %v443 = vsub.s32 0, %v442
        %v444 = vrot.slane %v432, %v443
        %v445 = vmul.f32 %v444, %v440
        %v446 = vadd.f32 %v439, %v445
        %447 = vst [vmem:[#allocation2] sm:$0x3] %v446
        %v448 = vld [vmem:[%s218] sm:$0x3]
        %v449 = vld [vmem:[#allocation2] sm:$0x3]
        %v450 = vadd.f32 %v448, %v449
        %451 = vst [vmem:[%s211] sm:$0x3] %v450
        %s452 = sand.u32 %s111, 1
        %s453 = scalar_lea.sflag [#allocation5], %s452
        %s454 = sand.u32 %s111, 1
        %s455 = smul.addr %s454, 2
        %s456 = scalar_lea.vmem [#allocation8], %s455
        // Predicated region
        $region41: #{tpu_custom_call.1} parent=31 // pred_check
          %p457 = pneg %p121
        $region42: #{tpu_custom_call.1} parent=31 // pred_check_branch
          %459 = sbr.rel (%p457) target = $region44
        $region43: #{tpu_custom_call.1} parent=31 // pred_region
          %s461 = ssub.s32 32, 32
          %462 = vsyncadd %s453, %s461
          %s463 = sadd.s32 %s24, %s23
          %s464 = smul.addr %s463, 32
          %s465 = scalar_lea.hbm %s3, %s464
          %s467 = sshll.u32 %s456, 4
          %s468 = int_to_ptr.vmem [resolvable:$true] %s467
          %470 = dma.vmem_to_hbm [thread:$0]  %s468, 32, %s465, %s453
        $region44: #{tpu_custom_call.1} parent=31 // pred_fallthru
          _
      $region32: #{tpu_custom_call.1} parent=5 // pred_fallthru
        _
      %p471 = scmp.le.s32.totalorder 2, %s14
      // Predicated region
      $region45: #{tpu_custom_call.1} parent=5 // pred_check
        %p472 = pneg %p471
      $region46: #{tpu_custom_call.1} parent=5 // pred_check_branch
        %474 = sbr.rel (%p472) target = $region48
      $region47: #{tpu_custom_call.1} parent=5 // pred_region
        %s475 = ssub.s32 %s14, 2
        // Predicated region
        $region49: #{tpu_custom_call.1} parent=47 // pred_check
          %p476 = pneg %p127
        $region50: #{tpu_custom_call.1} parent=47 // pred_check_branch
          %478 = sbr.rel (%p476) target = $region52
        $region51: #{tpu_custom_call.1} parent=47 // pred_region
          %s479 = sand.u32 %s112, 1
          %s480 = scalar_lea.sflag [#allocation5], %s479
          %s481 = sand.u32 %s112, 1
          %s482 = smul.addr %s481, 2
          %s483 = scalar_lea.vmem [#allocation8], %s482
          %484 = dma.done %s480, 32
        $region52: #{tpu_custom_call.1} parent=47 // pred_fallthru
          _
      $region48: #{tpu_custom_call.1} parent=5 // pred_fallthru
        _
    $region6: #{tpu_custom_call.1} parent=1 // loop_footer
      %s18 = sadd.s32 1, %s14
    $region7: #{tpu_custom_call.1} parent=1 // loop_footer_branch
      %13 = sbr.rel target = $region3
    $region8: #{tpu_custom_call.1} parent=1 // loop_exit
      _
    %485 = vsyncpa [#allocation4], 1
    %s486 = scalar_lea.sflag [#allocation4], 1
    %487 = vsyncpa %s486, 1
    %488 = vsyncpa [#allocation7], 1
    %489 = vsyncpa [#allocation5], 1
    %s490 = scalar_lea.sflag [#allocation5], 1
    %491 = vsyncpa %s490, 1

</llo_original>
